<compile_context>
chip_gen: v6e
topology: v6e:2x2x1
jax: 0.10.0
libtpu: 0.0.40
codegen_flags: <defaults>
</compile_context>

<pallas_src>
import jax
import jax.numpy as jnp
import numpy as np
from jax import lax
from jax.experimental import pallas as pl
from jax.experimental.pallas import tpu as pltpu

VOCAB = 256   # stand-in for 129407
EMBED = 128   # stand-in for 1280


def _round_up(a, m):
    return (a + m - 1) // m * m


# --------------------------------------------------------------------------
# embed=True path:  out = w[inputs]
# Batched gather: T tokens per grid step.  ids are scalar-prefetched into
# SMEM, w stays in HBM (memory_space=pl.ANY); the kernel issues T row DMAs
# into a (T, E) VMEM scratch and stores the whole lane-dense tile at once.
# Each grid step is self-contained, so the grid axis can be marked "parallel"
# (megacore-safe on v7x).  Cross-step double buffering was deliberately left
# out to keep the kernel megacore-safe; the T in-flight row DMAs per step
# already amortize DMA latency.
# --------------------------------------------------------------------------
def _gather_kernel(ids_ref, w_hbm, o_ref, rows, sem):
    i = pl.program_id(0)
    T = o_ref.shape[0]

    def issue(t, carry):
        tok = ids_ref[i * T + t]
        pltpu.make_async_copy(
            w_hbm.at[pl.ds(tok, 1)], rows.at[pl.ds(t, 1)], sem).start()
        return carry

    lax.fori_loop(0, T, issue, 0)

    def wait(t, carry):
        # wait amount only depends on dst size, so a fixed src slice is fine
        pltpu.make_async_copy(
            w_hbm.at[pl.ds(0, 1)], rows.at[pl.ds(t, 1)], sem).wait()
        return carry

    lax.fori_loop(0, T, wait, 0)

    o_ref[...] = rows[...]


def tied_embed(ids, w, *, block_tokens=128):
    B, S = ids.shape
    N = B * S
    V, E = w.shape

    # Guard against out-of-range / padding ids turning into OOB DMAs.
    flat_ids = jnp.clip(ids.reshape(N).astype(jnp.int32), 0, V - 1)

    T = min(block_tokens, _round_up(N, 8))      # tokens per grid step
    N_pad = _round_up(N, T)
    if N_pad != N:
        flat_ids = jnp.pad(flat_ids, (0, N_pad - N))

    out = pl.pallas_call(
        _gather_kernel,
        out_shape=jax.ShapeDtypeStruct((N_pad, E), w.dtype),
        grid_spec=pltpu.PrefetchScalarGridSpec(
            num_scalar_prefetch=1,
            grid=(N_pad // T,),
            in_specs=[pl.BlockSpec(memory_space=pl.ANY)],   # w stays in HBM
            out_specs=pl.BlockSpec((T, E), lambda i, ids_ref: (i, 0)),
            scratch_shapes=[
                pltpu.VMEM((T, E), w.dtype),
                pltpu.SemaphoreType.DMA(()),
            ],
        ),
        compiler_params=pltpu.CompilerParams(
            dimension_semantics=("parallel",)),
    )(flat_ids, w)
    return out[:N].reshape(B, S, E)


# --------------------------------------------------------------------------
# embed=False path:  out = inputs @ w.T + b
# 2-D grid (vocab outer, tokens inner): w tile index depends only on the
# vocab axis, so each vocab tile of w crosses HBM exactly once.  Inputs are
# streamed in bf16 (halves the dominant w HBM stream, bf16-native MXU on
# v5e/v6e/v7x); the accumulator / output stay f32.
# --------------------------------------------------------------------------
def _logits_kernel(x_ref, w_ref, b_ref, o_ref):
    # x_ref: (tm, E) bf16, w_ref: (tn, E) bf16, b_ref: (1, tn) f32
    acc = lax.dot_general(
        x_ref[...], w_ref[...],
        dimension_numbers=(((1,), (1,)), ((), ())),
        preferred_element_type=jnp.float32,
    )
    o_ref[...] = (acc + b_ref[...]).astype(o_ref.dtype)


def tied_logits(x, w, b, *, tm=256, tn=512, weight_dtype=jnp.bfloat16):
    B, S, E = x.shape
    M = B * S
    V = w.shape[0]

    xf = x.reshape(M, E).astype(weight_dtype)
    wf = w.astype(weight_dtype)

    tm = min(tm, _round_up(M, 8))        # token tile (multiple of 8)
    tn = min(tn, _round_up(V, 128))      # vocab tile (multiple of 128)
    M_pad = _round_up(M, tm)
    V_pad = _round_up(V, tn)
    if M_pad != M:
        xf = jnp.pad(xf, ((0, M_pad - M), (0, 0)))
    if V_pad != V:
        wf = jnp.pad(wf, ((0, V_pad - V), (0, 0)))
        b = jnp.pad(b, (0, V_pad - V))
    b2 = b.reshape(1, V_pad).astype(jnp.float32)

    # Explicit VMEM budget (double-buffered x / w / bias / out tiles) so the
    # same code stays inside v7x's 64 MiB VMEM and above v5e's 16 MiB default.
    in_bytes = jnp.dtype(weight_dtype).itemsize
    vmem_bytes = 2 * (tm * E * in_bytes + tn * E * in_bytes
                      + tn * 4 + tm * tn * 4) + (4 << 20)
    vmem_bytes = int(max(vmem_bytes, 16 << 20))

    out = pl.pallas_call(
        _logits_kernel,
        out_shape=jax.ShapeDtypeStruct((M_pad, V_pad), jnp.float32),
        grid=(V_pad // tn, M_pad // tm),          # vocab OUTER, tokens INNER
        in_specs=[
            pl.BlockSpec((tm, E), lambda j, i: (i, 0)),   # activation tile
            pl.BlockSpec((tn, E), lambda j, i: (j, 0)),   # w tile: vocab only
            pl.BlockSpec((1, tn), lambda j, i: (0, j)),   # bias tile
        ],
        out_specs=pl.BlockSpec((tm, tn), lambda j, i: (i, j)),
        compiler_params=pltpu.CompilerParams(
            dimension_semantics=("parallel", "parallel"),
            vmem_limit_bytes=vmem_bytes),
    )(xf, wf, b2)
    return out[:M, :V].reshape(B, S, V)


# --------------------------------------------------------------------------
if __name__ == "__main__":
    key = jax.random.PRNGKey(0)
    k_w, k_ids, _ = jax.random.split(key, 3)

    # Parameter init mirroring the PyTorch module:
    #   w ~ Normal(0, 0.01), b = zeros
    w = 0.01 * jax.random.normal(k_w, (VOCAB, EMBED), dtype=jnp.float32)
    b = jnp.zeros((VOCAB,), dtype=jnp.float32)

    B, S = 2, 8
    ids = jax.random.randint(k_ids, (B, S), 0, VOCAB, dtype=jnp.int32)

    # embed=True
    emb = tied_embed(ids, w)
    jax.block_until_ready(emb)
    np.testing.assert_allclose(np.asarray(emb), np.asarray(w)[np.asarray(ids)],
                               rtol=1e-6, atol=1e-6)

    # embed=False (logits over tied weights), fed with the embeddings.
    logits = tied_logits(emb, w, b)
    jax.block_until_ready(logits)

    # Reference with the same bf16 input rounding (accumulation is f32 in
    # both), so the check stays tight even though w/x are streamed in bf16.
    emb16 = emb.astype(jnp.bfloat16).astype(jnp.float32)
    w16 = w.astype(jnp.bfloat16).astype(jnp.float32)
    ref = jnp.einsum("bse,ve->bsv", emb16, w16,
                     precision=lax.Precision.HIGHEST) + b
    np.testing.assert_allclose(np.asarray(logits), np.asarray(ref),
                               rtol=1e-3, atol=1e-5)

    print("KERNEL_OK")
</pallas_src>

<mosaic_0001>
module attributes {stable_mosaic.version = 11 : i64} {
  func.func @_gather_kernel(%arg0: i32, %arg1: memref<16xi32, #tpu.memory_space<smem>>, %arg2: memref<256x128xf32, #tpu.memory_space<any>>, %arg3: memref<16x128xf32, #tpu.memory_space<vmem>>, %arg4: memref<16x128xf32, #tpu.memory_space<vmem>>, %arg5: memref<!tpu.dma_semaphore, #tpu.memory_space<semaphore_mem>>) attributes {dimension_semantics = [#tpu.dimension_semantics<parallel>], iteration_bounds = array<i64: 1>, scalar_prefetch = 1 : i64, scratch_operands = 2 : i64, tpu.core_type = #tpu.core_type<tc>, window_params = [{}, {transform_indices = @transform_1, window_bounds = array<i64: 16, 128>}]} {
    %c0_i32 = arith.constant 0 : i32
    %c16_i32 = arith.constant 16 : i32
    %0 = arith.addi %c0_i32, %c16_i32 : i32
    %c1_i32 = arith.constant 1 : i32
    scf.for %arg6 = %c0_i32 to %0 step %c1_i32  : i32 {
      %c16_i32_8 = arith.constant 16 : i32
      %4 = arith.muli %arg0, %c16_i32_8 : i32
      %5 = arith.addi %4, %arg6 : i32
      %6 = arith.index_cast %5 : i32 to index
      %7 = memref.load %arg1[%6] : memref<16xi32, #tpu.memory_space<smem>>
      %c0_i32_9 = arith.constant 0 : i32
      %8 = tpu.memref_slice %arg2[%7, %c0_i32_9] : memref<256x128xf32, #tpu.memory_space<any>> -> memref<1x128xf32, #tpu.memory_space<any>>
      %c0_i32_10 = arith.constant 0 : i32
      %9 = tpu.memref_slice %arg4[%arg6, %c0_i32_10] : memref<16x128xf32, #tpu.memory_space<vmem>> -> memref<1x128xf32, #tpu.memory_space<vmem>>
      tpu.enqueue_dma source(%8 : memref<1x128xf32, #tpu.memory_space<any>>) target(%9 : memref<1x128xf32, #tpu.memory_space<vmem>>) target_semaphore(%arg5 : memref<!tpu.dma_semaphore, #tpu.memory_space<semaphore_mem>>)
    }
    %c16_i32_0 = arith.constant 16 : i32
    %c0_i32_1 = arith.constant 0 : i32
    %c16_i32_2 = arith.constant 16 : i32
    %1 = arith.addi %c0_i32_1, %c16_i32_2 : i32
    %c1_i32_3 = arith.constant 1 : i32
    scf.for %arg6 = %c0_i32_1 to %1 step %c1_i32_3  : i32 {
      %c0_i32_8 = arith.constant 0 : i32
      %c0_i32_9 = arith.constant 0 : i32
      %4 = tpu.memref_slice %arg2[%c0_i32_8, %c0_i32_9] : memref<256x128xf32, #tpu.memory_space<any>> -> memref<1x128xf32, #tpu.memory_space<any>>
      %c0_i32_10 = arith.constant 0 : i32
      %5 = tpu.memref_slice %arg4[%arg6, %c0_i32_10] : memref<16x128xf32, #tpu.memory_space<vmem>> -> memref<1x128xf32, #tpu.memory_space<vmem>>
      tpu.wait_dma2 semaphore(%arg5 : memref<!tpu.dma_semaphore, #tpu.memory_space<semaphore_mem>>) src(%4 : memref<1x128xf32, #tpu.memory_space<any>>) dst(%5 : memref<1x128xf32, #tpu.memory_space<vmem>>)
    }
    %c16_i32_4 = arith.constant 16 : i32
    %c0 = arith.constant 0 : index
    %c0_5 = arith.constant 0 : index
    %2 = vector.load %arg4[%c0, %c0_5] : memref<16x128xf32, #tpu.memory_space<vmem>>, vector<16x128xf32>
    %c0_6 = arith.constant 0 : index
    %c0_7 = arith.constant 0 : index
    %3 = vector.load %arg3[%c0_6, %c0_7] : memref<16x128xf32, #tpu.memory_space<vmem>>, vector<16x128xf32>
    tpu.vector_store %arg3[%c0_6, %c0_7], %2 {strides = array<i32>} : memref<16x128xf32, #tpu.memory_space<vmem>>, vector<16x128xf32>,
    return
  }
  func.func @transform_1(%arg0: i32, %arg1: memref<16xi32, #tpu.memory_space<smem>>) -> (i32, i32) {
    %c0_i32 = arith.constant 0 : i32
    %c0_i32_0 = arith.constant 0 : i32
    return %arg0, %c0_i32 : i32, i32
  }
}

</mosaic_0001>

<llo_original>
// kernel: tpu_custom_call.1
$region0: #{tpu_custom_call.1}
  #allocation0 [shape = 'u32[]', space=smem, size = 0x4, offset = 0x4, fixed_abs, tag = 'smem constant byte address 0x4 - core index']
  #allocation1 [shape = 'u32[144,128]{1,0:T(1,128)}', space=vmem, size = 0x12000, scoped, tag = 'internal scratch']
  #allocation2 [shape = 'f32[16,128]{1,0:T(8,128)}', space=vmem, size = 0x2000, scoped, tag = 'scratch operand']
  #allocation3 [shape = 's32[1]{0}', space=sflag, size = 0x4, scoped, tag = 'scratch operand']
  #allocation4 [shape = 's32[1]{0}', space=sflag, size = 0x4, scoped, tag = 'scoped memory for tpu_custom_call.1']
  #allocation5 [shape = 'u8[512]{0}', space=smem, size = 0x200, scoped, tag = 'prefetched SMEM operand 0']
  #allocation8 [shape = 's32[]', space=sflag, size = 0x4, offset = 0, fixed_abs, tag = 'sflag constant byte address 0x0 - dummy sync flag']
  #allocation9 [shape = 's32[]', space=sflag, size = 0x4, offset = 0, fixed_abs, tag = 'sflag constant byte address 0x0 - dummy sync flag']
  #allocation10 [shape = 'u32[]', space=smem, size = 0x4, offset = 0x44, fixed_abs, tag = 'smem constant byte address 0x44 - assertion arg 0']
  #allocation11 [shape = 'u32[]', space=smem, size = 0x4, offset = 0x48, fixed_abs, tag = 'smem constant byte address 0x48 - assertion arg 1']
  %s0 = inlined_call_operand.hbm [shape: s32[16], index: 0, kind: input, shape index: {}]
  %s1 = inlined_call_operand.hbm [shape: f32[256,128], index: 1, kind: input, shape index: {}]
  %s2 = inlined_call_operand.hbm [shape: f32[16,128], index: 2, kind: output, shape index: {}]
  %s3 = sld [smem:[#allocation0]]
  $region28: #{tpu_custom_call.1} parent=0
    _
  %s5 = ssub.s32 1, %s3
  %s6 = scalar_select 0, %s5, %s3
  %8 = dma.hbm_to_smem %s0, 16, [#allocation5], [#allocation4]
  %9 = dma.done [#allocation4], 16
  %10 = sfence
  $region1: #{tpu_custom_call.1} parent=0
    #allocation6 [shape = 'u8[8192]{0}', space=vmem, size = 0x2000, scoped, tag = 'output window, operand 0, single buffered']
    #allocation7 [shape = 's32[1]{0}', space=sflag, size = 0x4, scoped, tag = 'scoped memory for tpu_custom_call.1']
    %11 = vsyncpa [#allocation7], 0
    loop: start=0, step=1, limit=16
    $region2: #{tpu_custom_call.1} parent=1 // loop_pre_header
      _
    $region3: #{tpu_custom_call.1} parent=1 // loop_header
      %s13 = sphi 0, %s17
      %p14 = scmp.ge.s32.totalorder %s13, 16
    $region4: #{tpu_custom_call.1} parent=1 // loop_header_branch
      %16 = sbr.rel (%p14) target = $region8
    $region5: #{tpu_custom_call.1} parent=1 // loop_body
      %s18 = smul.u32 0, 16
      %s19 = sadd.s32 %s18, %s13
      %s20 = sld [smem:[#allocation5 + %s19]]
      %s21 = smul.addr %s20, 16
      %s22 = scalar_lea.hbm %s1, %s21
      %s23 = scalar_lea.vmem [#allocation2], %s13
      // Predicated region
      $region9: #{tpu_custom_call.1} parent=5 // pred_check
        _
      $region10: #{tpu_custom_call.1} parent=5 // pred_check_branch
        %25 = sbr.rel target = $region12
      $region11: #{tpu_custom_call.1} parent=5 // pred_region
        %26 = sst [smem:[#allocation10]] [#allocation9]
        %27 = sst [smem:[#allocation11]] [#allocation8]
      $region12: #{tpu_custom_call.1} parent=5 // pred_fallthru
        _
      %29 = shalt.err (0)
      %s31 = sshll.u32 %s23, 4
      %s32 = int_to_ptr.vmem [resolvable:$true] %s31
      %34 = dma.hbm_to_vmem [thread:$0]  %s22, 16, %s32, [#allocation3]
    $region6: #{tpu_custom_call.1} parent=1 // loop_footer
      %s17 = sadd.s32 1, %s13
    $region7: #{tpu_custom_call.1} parent=1 // loop_footer_branch
      %12 = sbr.rel target = $region3
    $region8: #{tpu_custom_call.1} parent=1 // loop_exit
      _
    loop: start=0, step=1, limit=16
    $region13: #{tpu_custom_call.1} parent=1 // loop_pre_header
      _
    $region14: #{tpu_custom_call.1} parent=1 // loop_header
      %s36 = sphi 0, %s40
      %p37 = scmp.ge.s32.totalorder %s36, 16
    $region15: #{tpu_custom_call.1} parent=1 // loop_header_branch
      %39 = sbr.rel (%p37) target = $region19
    $region16: #{tpu_custom_call.1} parent=1 // loop_body
      %s41 = smul.u32 1, 1
      %s42 = sshll.u32 %s41, 4
      %43 = dma.done [#allocation3], %s42
    $region17: #{tpu_custom_call.1} parent=1 // loop_footer
      %s40 = sadd.s32 1, %s36
    $region18: #{tpu_custom_call.1} parent=1 // loop_footer_branch
      %35 = sbr.rel target = $region14
    $region19: #{tpu_custom_call.1} parent=1 // loop_exit
      _
    %v44 = vld [vmem:[#allocation2] sm:$0xff]
    %v45 = vld [vmem:[#allocation2 + $0x8] sm:$0xff]
    %46 = vst [vmem:[#allocation6] sm:$0xff] %v44
    %47 = vst [vmem:[#allocation6 + $0x8] sm:$0xff] %v45
    // Predicated region
    $region20: #{tpu_custom_call.1} parent=1 // pred_check
      _
    $region21: #{tpu_custom_call.1} parent=1 // pred_check_branch
      %49 = sbr.rel (0) target = $region23
    $region22: #{tpu_custom_call.1} parent=1 // pred_region
      %s51 = ssub.s32 256, 256
      %52 = vsyncadd [#allocation7], %s51
      %s53 = sshll.u32 [#allocation6], 4
      %s54 = int_to_ptr.vmem [resolvable:$true] %s53
      %59 = dma.vmem_to_hbm [thread:$0]  %s54, 256, %s2, [#allocation7], 128, 128, 8
    $region23: #{tpu_custom_call.1} parent=1 // pred_fallthru
      _
    // Predicated region
    $region24: #{tpu_custom_call.1} parent=1 // pred_check
      _
    $region25: #{tpu_custom_call.1} parent=1 // pred_check_branch
      %61 = sbr.rel (0) target = $region27
    $region26: #{tpu_custom_call.1} parent=1 // pred_region
      %62 = dma.done [#allocation7], 256
    $region27: #{tpu_custom_call.1} parent=1 // pred_fallthru
      _
    %63 = vsyncpa [#allocation7], 1
  %64 = vsyncmov [#allocation3]
  %s65 = vpop.sfrf %64
  %p66 = scmp.eq.s32.totalorder %s65, 0
  %p67 = pneg %p66
  %69 = shalt.err (%p67)

</llo_original>
